<compile_context>
chip_gen: v7x
topology: tpu7x:2x2x1
jax: 0.10.0
libtpu: 0.0.40
codegen_flags: <defaults>
</compile_context>

<pallas_src>
import functools
import math

import jax
import jax.numpy as jnp
from jax.experimental import pallas as pl
from jax.experimental.pallas import tpu as pltpu

EPS = 1e-5        # PyTorch LayerNorm default
NEG_INF = -1e9    # additive key-padding mask value


# --------------------------------------------------------------------------- helpers
def _layer_norm(y, g, b):
    """LayerNorm over the last dim; g/b shaped (1, D). Pure f32."""
    mu = jnp.mean(y, axis=-1, keepdims=True)
    var = jnp.mean(jnp.square(y - mu), axis=-1, keepdims=True)
    return (y - mu) * jax.lax.rsqrt(var + EPS) * g + b


def _vmem_limit_bytes():
    """~75% of physical VMEM: ~48 MiB on v7x (64 MiB), ~96 MiB on v5e/v6e (128 MiB)."""
    try:
        cap = int(pltpu.get_tpu_info().vmem_capacity_bytes)
    except Exception:
        cap = 64 * 1024 * 1024        # conservative fallback (v7x-sized)
    return int(cap * 3 // 4)


_BUFFERED_OK = None


def _buffered_weights_supported():
    """Probe once whether pipeline_mode=pl.Buffered(1) is accepted by this JAX build
    (single-buffers grid-constant weights, halving their VMEM residency)."""
    global _BUFFERED_OK
    if _BUFFERED_OK is None:
        try:
            def _k(x_ref, o_ref):
                o_ref[...] = x_ref[...]
            probe = pl.pallas_call(
                _k,
                out_shape=jax.ShapeDtypeStruct((8, 128), jnp.float32),
                grid=(1,),
                in_specs=[pl.BlockSpec((8, 128), lambda i: (0, 0),
                                       pipeline_mode=pl.Buffered(1))],
                out_specs=pl.BlockSpec((8, 128), lambda i: (0, 0)),
            )(jnp.zeros((8, 128), jnp.float32))
            jax.block_until_ready(probe)
            _BUFFERED_OK = True
        except Exception:
            _BUFFERED_OK = False
    return _BUFFERED_OK


def _weight_spec(a):
    """Full-array block with grid-constant index_map (weight stays resident across the grid);
    single-buffered when supported (v7x VMEM relief)."""
    idx = lambda b, _nd=a.ndim: (0,) * _nd
    if _buffered_weights_supported():
        return pl.BlockSpec(a.shape, idx, pipeline_mode=pl.Buffered(1))
    return pl.BlockSpec(a.shape, idx)


def _pick_block_batch(B, T):
    """Sequences per encoder grid step: push the matmul M dimension toward a >=256-row slab,
    keep >=2 grid steps (so both v7x TensorCores get work), and bound per-step activation
    VMEM by capping the slab at 512 rows."""
    best = 1
    for cand in range(1, B + 1):
        if B % cand:
            continue
        if B >= 2 and B // cand < 2:
            continue
        if cand * T <= 512:
            best = cand
    return best


# --------------------------------------------------------------------------- input projection (+ fused mask)
def _inproj_kernel(x_ref, w_ref, b_ref, o_ref, bias_ref):
    x = x_ref[...]                                                   # (tm, IN) f32
    y = jnp.dot(x.astype(jnp.bfloat16), w_ref[...],
                preferred_element_type=jnp.float32) + b_ref[...]
    o_ref[...] = y.astype(o_ref.dtype)                               # bf16 activations out
    # infer_mask_from_batch_data fused here: a frame is valid iff any feature != 0.
    valid = jnp.sum(jnp.abs(x), axis=-1, keepdims=True) > 0.0        # (tm, 1)
    bias_ref[...] = jnp.where(valid, 0.0, NEG_INF)


def _input_projection(x2d, w, b):
    M, K = x2d.shape
    N = w.shape[1]
    tm = M if M <= 512 else 512                                      # full-dim block or 8-aligned tile
    return pl.pallas_call(
        _inproj_kernel,
        out_shape=(jax.ShapeDtypeStruct((M, N), jnp.bfloat16),
                   jax.ShapeDtypeStruct((M, 1), jnp.float32)),
        grid=(pl.cdiv(M, tm),),
        in_specs=[pl.BlockSpec((tm, K), lambda i: (i, 0)),
                  _weight_spec(w),
                  _weight_spec(b)],
        out_specs=(pl.BlockSpec((tm, N), lambda i: (i, 0)),
                   pl.BlockSpec((tm, 1), lambda i: (i, 0))),
        compiler_params=pltpu.CompilerParams(
            dimension_semantics=("parallel",),
            vmem_limit_bytes=_vmem_limit_bytes()),
    )(x2d, w, b)


# --------------------------------------------------------------------------- encoder layer math (shared)
def _encoder_layer_math(x, bias_ref, ctx_ref,
                        wqkv, bqkv, wo, bo, g1, be1, w1, b1, w2, b2, g2, be2,
                        *, n_heads, block_b, seq_len):
    """One post-LN encoder layer on a (block_b*seq_len, D) f32 slab. Returns (block_b*T, D) f32."""
    T = seq_len
    D = x.shape[-1]
    hd = D // n_heads
    scale = 1.0 / math.sqrt(hd)

    # Fused Q/K/V projection: one MXU weight push, M = block_b*T rows.
    qkv = jnp.dot(x.astype(jnp.bfloat16), wqkv,
                  preferred_element_type=jnp.float32) + bqkv         # (Bb*T, 3D) f32

    # Per-sequence attention; heads write their context into the VMEM scratch so the
    # output projection is one full-K matmul afterwards.
    for bi in range(block_b):                                        # static unroll, Bb small
        rows = slice(bi * T, (bi + 1) * T)
        # hoist the (1,T)->(T,T) key-padding-bias broadcast out of the head loop
        kb = jnp.broadcast_to(bias_ref[bi], (T, T))
        q = qkv[rows, :D]
        k = qkv[rows, D:2 * D]
        v = qkv[rows, 2 * D:]
        for h in range(n_heads):                                     # static unroll, n_heads small
            sl = slice(h * hd, (h + 1) * hd)
            s = jax.lax.dot_general(q[:, sl].astype(jnp.bfloat16),
                                    k[:, sl].astype(jnp.bfloat16),
                                    (((1,), (1,)), ((), ())),
                                    preferred_element_type=jnp.float32) * scale + kb
            m = jnp.max(s, axis=-1, keepdims=True)
            p = jnp.exp(s - m)
            p = p * pl.reciprocal(jnp.sum(p, axis=-1, keepdims=True), approx=True)
            ctx_ref[rows, sl] = jnp.dot(p.astype(jnp.bfloat16),
                                        v[:, sl].astype(jnp.bfloat16),
                                        preferred_element_type=jnp.float32)

    # Single full-K output projection: (Bb*T, D) @ (D, D).
    attn = jnp.dot(ctx_ref[...].astype(jnp.bfloat16), wo,
                   preferred_element_type=jnp.float32) + bo
    h1 = _layer_norm(x + attn, g1, be1)

    ff = jnp.maximum(jnp.dot(h1.astype(jnp.bfloat16), w1,
                             preferred_element_type=jnp.float32) + b1, 0.0)
    ff = jnp.dot(ff.astype(jnp.bfloat16), w2,
                 preferred_element_type=jnp.float32) + b2
    return _layer_norm(h1 + ff, g2, be2)                             # (Bb*T, D) f32


# --------------------------------------------------------------------------- encoder layer kernels
def _encoder_layer_kernel(x_ref, bias_ref,
                          wqkv_ref, bqkv_ref, wo_ref, bo_ref,
                          g1_ref, be1_ref, w1_ref, b1_ref, w2_ref, b2_ref,
                          g2_ref, be2_ref,
                          o_ref, ctx_ref, *, n_heads):
    Bb, T, D = x_ref.shape
    x = x_ref[...].reshape(Bb * T, D).astype(jnp.float32)
    y = _encoder_layer_math(
        x, bias_ref, ctx_ref,
        wqkv_ref[...], bqkv_ref[...], wo_ref[...], bo_ref[...],
        g1_ref[...], be1_ref[...], w1_ref[...], b1_ref[...],
        w2_ref[...], b2_ref[...], g2_ref[...], be2_ref[...],
        n_heads=n_heads, block_b=Bb, seq_len=T)
    o_ref[...] = y.reshape(Bb, T, D).astype(o_ref.dtype)             # bf16 inter-layer activations


def _encoder_last_layer_kernel(x_ref, bias_ref,
                               wqkv_ref, bqkv_ref, wo_ref, bo_ref,
                               g1_ref, be1_ref, w1_ref, b1_ref, w2_ref, b2_ref,
                               g2_ref, be2_ref, wout_ref, bout_ref,
                               o_ref, ctx_ref, *, n_heads):
    Bb, T, D = x_ref.shape
    x = x_ref[...].reshape(Bb * T, D).astype(jnp.float32)
    y = _encoder_layer_math(
        x, bias_ref, ctx_ref,
        wqkv_ref[...], bqkv_ref[...], wo_ref[...], bo_ref[...],
        g1_ref[...], be1_ref[...], w1_ref[...], b1_ref[...],
        w2_ref[...], b2_ref[...], g2_ref[...], be2_ref[...],
        n_heads=n_heads, block_b=Bb, seq_len=T)
    # Fused classification head: mean over ALL timesteps (as in the spec), Linear, sigmoid.
    pooled = jnp.mean(y.reshape(Bb, T, D), axis=1)                   # (Bb, D)
    logits = jnp.dot(pooled.astype(jnp.bfloat16), wout_ref[...],
                     preferred_element_type=jnp.float32) + bout_ref[...]
    o_ref[...] = jax.nn.sigmoid(logits).reshape(Bb, 1, logits.shape[-1])


def _encoder_layer(x, attn_bias, layer_params, *, n_heads, block_b, head_params=None):
    B, T, D = x.shape
    nb = B // block_b
    weights = list(layer_params)
    if head_params is not None:
        w_out, b_out = head_params
        weights += [w_out, b_out]
        kernel = functools.partial(_encoder_last_layer_kernel, n_heads=n_heads)
        n_out = w_out.shape[1]
        out_shape = jax.ShapeDtypeStruct((B, 1, n_out), jnp.float32)
        out_spec = pl.BlockSpec((block_b, 1, n_out), lambda b: (b, 0, 0))
    else:
        kernel = functools.partial(_encoder_layer_kernel, n_heads=n_heads)
        out_shape = jax.ShapeDtypeStruct((B, T, D), jnp.bfloat16)    # bf16 inter-layer activations
        out_spec = pl.BlockSpec((block_b, T, D), lambda b: (b, 0, 0))
    return pl.pallas_call(
        kernel,
        out_shape=out_shape,
        grid=(nb,),
        in_specs=[pl.BlockSpec((block_b, T, D), lambda b: (b, 0, 0)),    # Bb sequences per step
                  pl.BlockSpec((block_b, 1, T), lambda b: (b, 0, 0))]    # their key-padding bias
                 + [_weight_spec(p) for p in weights],                   # resident layer weights
        out_specs=out_spec,
        scratch_shapes=[pltpu.VMEM((block_b * T, D), jnp.float32)],      # per-head context scratch
        compiler_params=pltpu.CompilerParams(
            dimension_semantics=("parallel",),                           # batch splits across TCs
            vmem_limit_bytes=_vmem_limit_bytes()),
    )(x, attn_bias, *weights)


# --------------------------------------------------------------------------- full forward
def transformer_classifier_forward(x, params, *, n_heads):
    """x: (B, T, in_size)  ->  sigmoid probabilities (B, out_size)."""
    w_in, b_in, layers, w_out, b_out = params
    B, T, IN = x.shape
    D = w_in.shape[1]
    n_layers = len(layers)

    # Tiled input projection with fused mask inference (single HBM read of x).
    h2d, bias2d = _input_projection(x.astype(jnp.float32).reshape(B * T, IN), w_in, b_in)
    h = h2d.reshape(B, T, D)                       # bf16
    attn_bias = bias2d.reshape(B, 1, T)            # (B, 1, T) additive key-padding bias (0 / -1e9)

    block_b = _pick_block_batch(B, T)

    for li, lp in enumerate(layers):
        is_last = (li == n_layers - 1)
        h = _encoder_layer(h, attn_bias, lp, n_heads=n_heads, block_b=block_b,
                           head_params=(w_out, b_out) if is_last else None)
    return h.reshape(B, w_out.shape[1])


# --------------------------------------------------------------------------- params / reference
def init_params(key, in_size, inner, ff, out_size, n_layers):
    """Matmul weights in bf16 (f32-accumulated in the kernels); biases / LN params in f32."""
    def wgt(k, shape, s=0.1):
        return (s * jax.random.normal(k, shape, jnp.float32)).astype(jnp.bfloat16)

    def vec(k, shape, s=0.05):
        return s * jax.random.normal(k, shape, jnp.float32)

    ks = iter(jax.random.split(key, 4 + 12 * n_layers))
    w_in = wgt(next(ks), (in_size, inner))
    b_in = vec(next(ks), (1, inner))
    layers = []
    for _ in range(n_layers):
        layers.append((
            wgt(next(ks), (inner, 3 * inner)),        # fused Wqkv
            vec(next(ks), (1, 3 * inner)),            # fused bqkv
            wgt(next(ks), (inner, inner)),            # Wo
            vec(next(ks), (1, inner)),                # bo
            1.0 + vec(next(ks), (1, inner)),          # ln1 gamma
            vec(next(ks), (1, inner)),                # ln1 beta
            wgt(next(ks), (inner, ff)),               # FFN W1
            vec(next(ks), (1, ff)),                   # FFN b1
            wgt(next(ks), (ff, inner)),               # FFN W2
            vec(next(ks), (1, inner)),                # FFN b2
            1.0 + vec(next(ks), (1, inner)),          # ln2 gamma
            vec(next(ks), (1, inner)),                # ln2 beta
        ))
    w_out = wgt(next(ks), (inner, out_size))
    b_out = vec(next(ks), (1, out_size))
    return (w_in, b_in, tuple(layers), w_out, b_out)


def reference(x, params, *, n_heads):
    """Pure-JAX f32 reference of the same forward pass (for correctness check)."""
    w_in, b_in, layers, w_out, b_out = params
    f = lambda a: a.astype(jnp.float32)
    B, T, _ = x.shape
    mask = jnp.abs(x).sum(axis=2) > 0
    kbias = jnp.where(mask, 0.0, NEG_INF)[:, None, :]                 # (B, 1, T)

    h = x.astype(jnp.float32) @ f(w_in) + b_in
    D = h.shape[-1]
    hd = D // n_heads
    scale = 1.0 / math.sqrt(hd)

    for (wqkv, bqkv, wo, bo, g1, be1, w1, b1, w2, b2, g2, be2) in layers:
        qkv = h @ f(wqkv) + bqkv
        q, k, v = qkv[..., :D], qkv[..., D:2 * D], qkv[..., 2 * D:]
        ctx = []
        for i in range(n_heads):
            sl = slice(i * hd, (i + 1) * hd)
            s = jnp.einsum('btd,bsd->bts', q[..., sl], k[..., sl]) * scale + kbias
            p = jax.nn.softmax(s, axis=-1)
            ctx.append(jnp.einsum('bts,bsd->btd', p, v[..., sl]))
        ctx = jnp.concatenate(ctx, axis=-1)
        h = _layer_norm(h + ctx @ f(wo) + bo, g1, be1)
        ff = jnp.maximum(h @ f(w1) + b1, 0.0) @ f(w2) + b2
        h = _layer_norm(h + ff, g2, be2)

    pooled = h.mean(axis=1)
    return jax.nn.sigmoid(pooled @ f(w_out) + b_out)


if __name__ == "__main__":
    # Small synthetic shapes consistent with the module's forward.
    B, T = 2, 8
    IN = 16            # in_size
    D = 32             # inner_size
    HEADS = 4
    FF = 64            # encoder feed-forward width (transf_kwargs stand-in)
    N_LAYERS = 2
    OUT = 12           # out_size

    key = jax.random.PRNGKey(0)
    kx, kp = jax.random.split(key)
    x = jax.random.normal(kx, (B, T, IN), jnp.float32)

    # Variable-length sequences: trailing frames all-zero so the mask can be inferred from data.
    lengths = jnp.array([8, 5], jnp.int32)
    valid = (jnp.arange(T)[None, :] < lengths[:, None]).astype(jnp.float32)
    x = x * valid[:, :, None]

    params = init_params(kp, IN, D, FF, OUT, N_LAYERS)

    out = transformer_classifier_forward(x, params, n_heads=HEADS)
    out = jax.block_until_ready(out)

    ref = reference(x, params, n_heads=HEADS)
    assert out.shape == (B, OUT)
    err = float(jnp.max(jnp.abs(out - ref)))
    assert jnp.allclose(out, ref, rtol=2e-2, atol=2e-2), err
    print("KERNEL_OK")
</pallas_src>

<mosaic_0001>
module attributes {stable_mosaic.version = 11 : i64} {
  func.func @_k(%arg0: i32, %arg1: memref<8x128xf32, #tpu.memory_space<vmem>>, %arg2: memref<8x128xf32, #tpu.memory_space<vmem>>) attributes {dimension_semantics = [#tpu.dimension_semantics<arbitrary>], iteration_bounds = array<i64: 1>, scalar_prefetch = 0 : i64, scratch_operands = 0 : i64, tpu.core_type = #tpu.core_type<tc>, window_params = [{pipeline_mode = #tpu.pipeline_mode<synchronous>, transform_indices = @transform_0, window_bounds = array<i64: 8, 128>}, {pipeline_mode = #tpu.pipeline_mode<synchronous>, transform_indices = @transform_1, window_bounds = array<i64: 8, 128>}]} {
    %c0 = arith.constant 0 : index
    %c0_0 = arith.constant 0 : index
    %0 = vector.load %arg1[%c0, %c0_0] : memref<8x128xf32, #tpu.memory_space<vmem>>, vector<8x128xf32>
    %c0_1 = arith.constant 0 : index
    %c0_2 = arith.constant 0 : index
    %1 = vector.load %arg2[%c0_1, %c0_2] : memref<8x128xf32, #tpu.memory_space<vmem>>, vector<8x128xf32>
    tpu.vector_store %arg2[%c0_1, %c0_2], %0 {strides = array<i32>} : memref<8x128xf32, #tpu.memory_space<vmem>>, vector<8x128xf32>,
    return
  }
  func.func @transform_0(%arg0: i32) -> (i32, i32) {
    %c0_i32 = arith.constant 0 : i32
    %c0_i32_0 = arith.constant 0 : i32
    %c0_i32_1 = arith.constant 0 : i32
    return %c0_i32, %c0_i32_0 : i32, i32
  }
  func.func @transform_1(%arg0: i32) -> (i32, i32) {
    %c0_i32 = arith.constant 0 : i32
    %c0_i32_0 = arith.constant 0 : i32
    %c0_i32_1 = arith.constant 0 : i32
    return %c0_i32, %c0_i32_0 : i32, i32
  }
}

module attributes {stable_mosaic.version = 11 : i64} {
  func.func @_inproj_kernel(%arg0: i32, %arg1: memref<16x16xf32, #tpu.memory_space<vmem>>, %arg2: memref<16x32xbf16, #tpu.memory_space<vmem>>, %arg3: memref<1x32xf32, #tpu.memory_space<vmem>>, %arg4: memref<16x32xbf16, #tpu.memory_space<vmem>>, %arg5: memref<16x1xf32, #tpu.memory_space<vmem>>) attributes {dimension_semantics = [#tpu.dimension_semantics<parallel>], iteration_bounds = array<i64: 1>, scalar_prefetch = 0 : i64, scratch_operands = 0 : i64, tpu.core_type = #tpu.core_type<tc>, window_params = [{transform_indices = @transform_0, window_bounds = array<i64: 16, 16>}, {pipeline_mode = #tpu.pipeline_mode<synchronous>, transform_indices = @transform_1, window_bounds = array<i64: 16, 32>}, {pipeline_mode = #tpu.pipeline_mode<synchronous>, transform_indices = @transform_2, window_bounds = array<i64: 1, 32>}, {transform_indices = @transform_3, window_bounds = array<i64: 16, 32>}, {transform_indices = @transform_4, window_bounds = array<i64: 16, 1>}]} {
    %c0 = arith.constant 0 : index
    %c0_0 = arith.constant 0 : index
    %0 = vector.load %arg1[%c0, %c0_0] : memref<16x16xf32, #tpu.memory_space<vmem>>, vector<16x16xf32>
    %1 = arith.truncf %0 : vector<16x16xf32> to vector<16x16xbf16>
    %c0_1 = arith.constant 0 : index
    %c0_2 = arith.constant 0 : index
    %2 = vector.load %arg2[%c0_1, %c0_2] : memref<16x32xbf16, #tpu.memory_space<vmem>>, vector<16x32xbf16>
    %cst = arith.constant dense<0.000000e+00> : vector<16x32xf32>
    %3 = tpu.matmul %1, %2, %cst {dimension_numbers = #tpu.dot_dimension_numbers<[1], [0], [0], [1], [0, 0, 1, 1], [], []>} : vector<16x16xbf16>, vector<16x32xbf16>, vector<16x32xf32> -> vector<16x32xf32>
    %c0_3 = arith.constant 0 : index
    %c0_4 = arith.constant 0 : index
    %4 = vector.load %arg3[%c0_3, %c0_4] : memref<1x32xf32, #tpu.memory_space<vmem>>, vector<1x32xf32>
    %5 = vector.broadcast %4 : vector<1x32xf32> to vector<16x32xf32>
    %6 = arith.addf %3, %5 : vector<16x32xf32>
    %7 = arith.truncf %6 : vector<16x32xf32> to vector<16x32xbf16>
    %c0_5 = arith.constant 0 : index
    %c0_6 = arith.constant 0 : index
    %8 = vector.load %arg4[%c0_5, %c0_6] : memref<16x32xbf16, #tpu.memory_space<vmem>>, vector<16x32xbf16>
    tpu.vector_store %arg4[%c0_5, %c0_6], %7 {strides = array<i32>} : memref<16x32xbf16, #tpu.memory_space<vmem>>, vector<16x32xbf16>,
    %9 = math.absf %0 : vector<16x16xf32>
    %cst_7 = arith.constant dense<0.000000e+00> : vector<16xf32>
    %10 = vector.multi_reduction <add>, %9, %cst_7 [1] : vector<16x16xf32> to vector<16xf32>
    %11 = vector.shape_cast %10 : vector<16xf32> to vector<16x1xf32>
    %cst_8 = arith.constant 0.000000e+00 : f32
    %12 = vector.broadcast %cst_8 : f32 to vector<16x1xf32>
    %13 = arith.cmpf ogt, %11, %12 : vector<16x1xf32>
    %cst_9 = arith.constant 0.000000e+00 : f32
    %cst_10 = arith.constant -1.000000e+09 : f32
    %14 = vector.broadcast %cst_9 : f32 to vector<16x1xf32>
    %15 = vector.broadcast %cst_10 : f32 to vector<16x1xf32>
    %16 = arith.select %13, %14, %15 : vector<16x1xi1>, vector<16x1xf32>
    %c0_11 = arith.constant 0 : index
    %c0_12 = arith.constant 0 : index
    %17 = vector.load %arg5[%c0_11, %c0_12] : memref<16x1xf32, #tpu.memory_space<vmem>>, vector<16x1xf32>
    tpu.vector_store %arg5[%c0_11, %c0_12], %16 {strides = array<i32>} : memref<16x1xf32, #tpu.memory_space<vmem>>, vector<16x1xf32>,
    return
  }
  func.func @transform_0(%arg0: i32) -> (i32, i32) {
    %c0_i32 = arith.constant 0 : i32
    %c0_i32_0 = arith.constant 0 : i32
    return %arg0, %c0_i32 : i32, i32
  }
  func.func @transform_1(%arg0: i32) -> (i32, i32) {
    %c0_i32 = arith.constant 0 : i32
    %c0_i32_0 = arith.constant 0 : i32
    %c0_i32_1 = arith.constant 0 : i32
    return %c0_i32, %c0_i32_0 : i32, i32
  }
  func.func @transform_2(%arg0: i32) -> (i32, i32) {
    %c0_i32 = arith.constant 0 : i32
    %c0_i32_0 = arith.constant 0 : i32
    %c0_i32_1 = arith.constant 0 : i32
    return %c0_i32, %c0_i32_0 : i32, i32
  }
  func.func @transform_3(%arg0: i32) -> (i32, i32) {
    %c0_i32 = arith.constant 0 : i32
    %c0_i32_0 = arith.constant 0 : i32
    return %arg0, %c0_i32 : i32, i32
  }
  func.func @transform_4(%arg0: i32) -> (i32, i32) {
    %c0_i32 = arith.constant 0 : i32
    %c0_i32_0 = arith.constant 0 : i32
    return %arg0, %c0_i32 : i32, i32
  }
}

</mosaic_0001>

<llo_original>
// kernel: tpu_custom_call.1
$region0: #{tpu_custom_call.1}
  #allocation0 [shape = 'u32[]', space=smem, size = 0x4, offset = 0x4, fixed_abs, tag = 'smem constant byte address 0x4 - core index']
  #allocation1 [shape = 'u32[144,128]{1,0:T(1,128)}', space=vmem, size = 0x12000, scoped, tag = 'internal scratch']
  %s0 = inlined_call_operand.hbm [shape: f32[8,128], index: 0, kind: input, shape index: {}]
  %s1 = inlined_call_operand.hbm [shape: f32[8,128], index: 1, kind: output, shape index: {}]
  %s2 = sld [smem:[#allocation0]]
  $region18: #{tpu_custom_call.1} parent=0
    _
  %s4 = ssub.s32 1, %s2
  %s5 = scalar_select 0, %s4, %s2
  $region1: #{tpu_custom_call.1} parent=0
    #allocation2 [shape = 'u8[4096]{0}', space=vmem, size = 0x1000, scoped, tag = 'input window, operand 0, single buffered']
    #allocation3 [shape = 's32[1]{0}', space=sflag, size = 0x4, scoped, tag = 'scoped memory for tpu_custom_call.1']
    #allocation4 [shape = 's32[1]{0}', space=sflag, size = 0x4, scoped, tag = 'scoped memory for tpu_custom_call.1']
    #allocation5 [shape = 'u8[4096]{0}', space=vmem, size = 0x1000, scoped, tag = 'output window, operand 0, single buffered']
    %6 = vsyncpa [#allocation3], 0
    %7 = vsyncpa [#allocation4], 0
    // Predicated region
    $region2: #{tpu_custom_call.1} parent=1 // pred_check
      _
    $region3: #{tpu_custom_call.1} parent=1 // pred_check_branch
      %9 = sbr.rel (0) target = $region5
    $region4: #{tpu_custom_call.1} parent=1 // pred_region
      %s11 = ssub.s32 128, 128
      %12 = vsyncadd [#allocation3], %s11
      %s14 = sshll.u32 [#allocation2], 4
      %s15 = int_to_ptr.vmem [resolvable:$true] %s14
      %17 = dma.hbm_to_vmem [thread:$0]  %s0, 128, %s15, [#allocation3]
    $region5: #{tpu_custom_call.1} parent=1 // pred_fallthru
      _
    // Predicated region
    $region6: #{tpu_custom_call.1} parent=1 // pred_check
      _
    $region7: #{tpu_custom_call.1} parent=1 // pred_check_branch
      %19 = sbr.rel (0) target = $region9
    $region8: #{tpu_custom_call.1} parent=1 // pred_region
      %20 = dma.done [#allocation3], 128
    $region9: #{tpu_custom_call.1} parent=1 // pred_fallthru
      _
    %v21 = vld [vmem:[#allocation2] sm:$0xff]
    %22 = vst [vmem:[#allocation5] sm:$0xff] %v21
    // Predicated region
    $region10: #{tpu_custom_call.1} parent=1 // pred_check
      _
    $region11: #{tpu_custom_call.1} parent=1 // pred_check_branch
      %24 = sbr.rel (0) target = $region13
    $region12: #{tpu_custom_call.1} parent=1 // pred_region
      %s26 = ssub.s32 128, 128
      %27 = vsyncadd [#allocation4], %s26
      %s29 = sshll.u32 [#allocation5], 4
      %s30 = int_to_ptr.vmem [resolvable:$true] %s29
      %32 = dma.vmem_to_hbm [thread:$0]  %s30, 128, %s1, [#allocation4]
    $region13: #{tpu_custom_call.1} parent=1 // pred_fallthru
      _
    // Predicated region
    $region14: #{tpu_custom_call.1} parent=1 // pred_check
      _
    $region15: #{tpu_custom_call.1} parent=1 // pred_check_branch
      %34 = sbr.rel (0) target = $region17
    $region16: #{tpu_custom_call.1} parent=1 // pred_region
      %35 = dma.done [#allocation4], 128
    $region17: #{tpu_custom_call.1} parent=1 // pred_fallthru
      _
    %36 = vsyncpa [#allocation3], 1
    %37 = vsyncpa [#allocation4], 1

// kernel: tpu_custom_call.1
$region0: #{tpu_custom_call.1}
  #allocation0 [shape = 'u32[]', space=smem, size = 0x4, offset = 0x4, fixed_abs, tag = 'smem constant byte address 0x4 - core index']
  #allocation1 [shape = 'u32[144,128]{1,0:T(1,128)}', space=vmem, size = 0x12000, scoped, tag = 'internal scratch']
  %s0 = inlined_call_operand.hbm [shape: f32[16,16], index: 0, kind: input, shape index: {}]
  %s1 = inlined_call_operand.hbm [shape: bf16[16,32], index: 1, kind: input, shape index: {}]
  %s2 = inlined_call_operand.vmem [shape: f32[1,32], index: 2, kind: input, shape index: {}]
  %s3 = inlined_call_operand.hbm [shape: bf16[16,32], index: 3, kind: output, shape index: {0}]
  %s4 = inlined_call_operand.vmem [shape: f32[16,1], index: 4, kind: output, shape index: {1}]
  %5 = xla_tuple %s3, %s4
  %s6 = sld [smem:[#allocation0]]
  $region38: #{tpu_custom_call.1} parent=0
    _
  %s8 = ssub.s32 1, %s6
  %s9 = scalar_select 0, %s8, %s6
  $region1: #{tpu_custom_call.1} parent=0
    #allocation2 [shape = 'u8[8192]{0}', space=vmem, size = 0x2000, scoped, tag = 'input window, operand 0, single buffered']
    #allocation3 [shape = 's32[1]{0}', space=sflag, size = 0x4, scoped, tag = 'scoped memory for tpu_custom_call.1']
    #allocation4 [shape = 's32[1]{0}', space=sflag, size = 0x4, scoped, tag = 'scoped memory for tpu_custom_call.1']
    #allocation5 [shape = 'u8[4096]{0}', space=vmem, size = 0x1000, scoped, tag = 'input window, operand 1, single buffered']
    #allocation6 [shape = 's32[1]{0}', space=sflag, size = 0x4, scoped, tag = 'scoped memory for tpu_custom_call.1']
    #allocation7 [shape = 'u8[4096]{0}', space=vmem, size = 0x1000, scoped, tag = 'output window, operand 0, single buffered']
    %10 = vsyncpa [#allocation3], 0
    %11 = vsyncpa [#allocation6], 0
    %12 = vsyncpa [#allocation4], 0
    // Predicated region
    $region2: #{tpu_custom_call.1} parent=1 // pred_check
      _
    $region3: #{tpu_custom_call.1} parent=1 // pred_check_branch
      %14 = sbr.rel (0) target = $region5
    $region4: #{tpu_custom_call.1} parent=1 // pred_region
      %s16 = ssub.s32 256, 256
      %17 = vsyncadd [#allocation3], %s16
      %s18 = sshll.u32 [#allocation2], 4
      %s19 = int_to_ptr.vmem [resolvable:$true] %s18
      %24 = dma.hbm_to_vmem [thread:$0]  %s0, 256, %s19, [#allocation3], 128, 128, 8
    $region5: #{tpu_custom_call.1} parent=1 // pred_fallthru
      _
    // Predicated region
    $region6: #{tpu_custom_call.1} parent=1 // pred_check
      _
    $region7: #{tpu_custom_call.1} parent=1 // pred_check_branch
      %26 = sbr.rel (0) target = $region9
    $region8: #{tpu_custom_call.1} parent=1 // pred_region
      %s28 = ssub.s32 128, 128
      %29 = vsyncadd [#allocation6], %s28
      %s30 = sshll.u32 [#allocation5], 4
      %s31 = int_to_ptr.vmem [resolvable:$true] %s30
      %36 = dma.hbm_to_vmem [thread:$0]  %s1, 128, %s31, [#allocation6], 64, 64, 4
    $region9: #{tpu_custom_call.1} parent=1 // pred_fallthru
      _
    // Predicated region
    $region10: #{tpu_custom_call.1} parent=1 // pred_check
      _
    $region11: #{tpu_custom_call.1} parent=1 // pred_check_branch
      %38 = sbr.rel (0) target = $region13
    $region12: #{tpu_custom_call.1} parent=1 // pred_region
      _
    $region13: #{tpu_custom_call.1} parent=1 // pred_fallthru
      _
    // Predicated region
    $region14: #{tpu_custom_call.1} parent=1 // pred_check
      _
    $region15: #{tpu_custom_call.1} parent=1 // pred_check_branch
      %40 = sbr.rel (0) target = $region17
    $region16: #{tpu_custom_call.1} parent=1 // pred_region
      %41 = dma.done [#allocation3], 256
    $region17: #{tpu_custom_call.1} parent=1 // pred_fallthru
      _
    // Predicated region
    $region18: #{tpu_custom_call.1} parent=1 // pred_check
      _
    $region19: #{tpu_custom_call.1} parent=1 // pred_check_branch
      %43 = sbr.rel (0) target = $region21
    $region20: #{tpu_custom_call.1} parent=1 // pred_region
      %44 = dma.done [#allocation6], 128
    $region21: #{tpu_custom_call.1} parent=1 // pred_fallthru
      _
    %v46 = vld [vmem:[#allocation2] sm:$0xff]
    %v47 = vld [vmem:[#allocation2 + $0x8] sm:$0xff]
    %v48 = vpack.c.bf16 %v47, %v46
    %v49 = vld [vmem:[#allocation5] sm:$0xf]
    %v50 = vld [vmem:[#allocation5 + $0x4] sm:$0xf]
    %v51 = vld [vmem:[%s2] sm:$0x1]
    %v53 = vlaneseq
    %v54 = vshrl.u32 %v53, 7
    %v55 = vsub.s32 0, %v54
    %v56 = vrot.slane %v51, %v55
    %v60 = vunpack.c.l.b16 %v49
    %v61 = vunpack.c.l.b16 %v50
    %v62 = vpack.c.b16 %v61, %v60
    %vm64 = vcmask 130048
    %v66 = vsel %vm64, %v48, 0
    %68 = vmatprep.subr.bf16.mxu0 0
    %69 = vmatpush1.bf16.msra.mxu0 %v62
    %70 = vmatprep.subr.bf16.mxu0 0
    %71 = vmatpush1.bf16.msra.mxu0 0
    %72 = vmatprep.subr.bf16.mxu0 0
    %73 = vmatpush1.bf16.msra.mxu0 0
    %74 = vmatprep.subr.bf16.mxu0 0
    %75 = vmatpush1.bf16.msra.mxu0 0
    %76 = vmatprep.subr.bf16.mxu0 0
    %77 = vmatpush1.bf16.msra.mxu0 0
    %78 = vmatprep.subr.bf16.mxu0 0
    %79 = vmatpush1.bf16.msra.mxu0 0
    %80 = vmatprep.subr.bf16.mxu0 0
    %81 = vmatpush1.bf16.msra.mxu0 0
    %82 = vmatprep.subr.bf16.mxu0 0
    %83 = vmatpush1.bf16.msra.mxu0 0
    %84 = vmatprep.subr.bf16.mxu0 0
    %85 = vmatpush1.bf16.msra.mxu0 0
    %86 = vmatprep.subr.bf16.mxu0 0
    %87 = vmatpush1.bf16.msra.mxu0 0
    %88 = vmatprep.subr.bf16.mxu0 0
    %89 = vmatpush1.bf16.msra.mxu0 0
    %90 = vmatprep.subr.bf16.mxu0 0
    %91 = vmatpush1.bf16.msra.mxu0 0
    %92 = vmatprep.subr.bf16.mxu0 0
    %93 = vmatpush1.bf16.msra.mxu0 0
    %94 = vmatprep.subr.bf16.mxu0 0
    %95 = vmatpush1.bf16.msra.mxu0 0
    %96 = vmatprep.subr.bf16.mxu0 0
    %97 = vmatpush1.bf16.msra.mxu0 0
    %98 = vmatprep.subr.bf16.mxu0 0
    %99 = vmatpush1.bf16.msra.mxu0 0
    %100 = vmatprep.mubr.bf16.mxu0 0
    %101 = vmatmul.mubr.bf16.gmra.mrb[0].mxu0 %v66
    %v102 = vpop.f32.mrb[0].mxu0
    %v103 = vadd.f32 %v56, %v102
    %v104 = vpop.f32.mrb[0].mxu0
    %v105 = vpop.f32.mrb[0].mxu0
    %v106 = vadd.f32 %v56, %v105
    %v107 = vpop.f32.mrb[0].mxu0
    %108 = vdwg.mxu0
    %v109 = vpack.c.bf16 %v106, %v103
    %v111 = vunpack.c.l.b16 %v109
    %v112 = vunpack.c.h.b16 %v109
    %v113 = vpack.c.b16 %v111, %v111
    %v114 = vpack.c.b16 %v112, %v112
    %vm117 = vcmask 257024
    %118 = vst.msk [vmem:[#allocation7] sm:$0xf] %vm117, %v113
    %119 = vst.msk [vmem:[#allocation7 + $0x4] sm:$0xf] %vm117, %v114
    %v120 = vand.u32 2147483647, %v46
    %v121 = vand.u32 2147483647, %v47
    %v122 = vsel %vm64, %v120, 0.0
    %123 = vadd.xlane.f32.xlu0 %v122
    %v124 = vpop.xlane.xlu0 %123
    %v125 = vsel %vm64, %v121, 0.0
    %126 = vadd.xlane.f32.xlu0 %v125
    %v127 = vpop.xlane.xlu0 %126
    %vm128 = vcmp.gt.f32.partialorder %v124, 0.0
    %vm129 = vcmp.gt.f32.partialorder %v127, 0.0
    %v130 = vsel %vm128, 0.0, -1e+09
    %v131 = vsel %vm129, 0.0, -1e+09
    %vm132 = vcmask 7168
    %133 = vst.msk [vmem:[%s4] sm:$0xff] %vm132, %v130
    %134 = vst.msk [vmem:[%s4 + $0x8] sm:$0xff] %vm132, %v131
    // Predicated region
    $region22: #{tpu_custom_call.1} parent=1 // pred_check
      _
    $region23: #{tpu_custom_call.1} parent=1 // pred_check_branch
      %136 = sbr.rel (0) target = $region25
    $region24: #{tpu_custom_call.1} parent=1 // pred_region
      %s138 = ssub.s32 128, 128
      %139 = vsyncadd [#allocation4], %s138
      %s140 = sshll.u32 [#allocation7], 4
      %s141 = int_to_ptr.vmem [resolvable:$true] %s140
      %146 = dma.vmem_to_hbm [thread:$0]  %s141, 128, %s3, [#allocation4], 64, 64, 4
    $region25: #{tpu_custom_call.1} parent=1 // pred_fallthru
      _
    // Predicated region
    $region26: #{tpu_custom_call.1} parent=1 // pred_check
      _
    $region27: #{tpu_custom_call.1} parent=1 // pred_check_branch
      %148 = sbr.rel (0) target = $region29
    $region28: #{tpu_custom_call.1} parent=1 // pred_region
      _
    $region29: #{tpu_custom_call.1} parent=1 // pred_fallthru
      _
    // Predicated region
    $region30: #{tpu_custom_call.1} parent=1 // pred_check
      _
    $region31: #{tpu_custom_call.1} parent=1 // pred_check_branch
      %150 = sbr.rel (0) target = $region33
    $region32: #{tpu_custom_call.1} parent=1 // pred_region
      %151 = dma.done [#allocation4], 128
    $region33: #{tpu_custom_call.1} parent=1 // pred_fallthru
      _
    // Predicated region
    $region34: #{tpu_custom_call.1} parent=1 // pred_check
      _
    $region35: #{tpu_custom_call.1} parent=1 // pred_check_branch
      %153 = sbr.rel (0) target = $region37
    $region36: #{tpu_custom_call.1} parent=1 // pred_region
      _
    $region37: #{tpu_custom_call.1} parent=1 // pred_fallthru
      _
    %154 = vsyncpa [#allocation3], 1
    %155 = vsyncpa [#allocation6], 1
    %156 = vsyncpa [#allocation4], 1

</llo_original>
